<compile_context>
chip_gen: v5e
topology: v5e:2x2
jax: 0.10.0
libtpu: 0.0.40
codegen_flags: <defaults>
</compile_context>

<pallas_src>
import jax
import jax.numpy as jnp
from jax.experimental import pallas as pl
from jax.experimental.pallas import tpu as pltpu

_LANE = 128
_SUBLANE_F32 = 8


def _add_pos_kernel(x_ref, pos_ref, o_ref):
    # x_ref:   (TB, C) rows x lane-chunk of the flattened input.
    # pos_ref: (1, C)  matching lane-chunk of the positional row (broadcast over TB).
    o_ref[...] = x_ref[...] + pos_ref[...]


def _sublane_multiple(dtype):
    """Dtype-aware sublane packing: 8 rows for 32-bit, 16 for 16-bit, 32 for 8-bit."""
    itemsize = jnp.dtype(dtype).itemsize
    return max(_SUBLANE_F32, (_SUBLANE_F32 * 4) // max(itemsize, 1))


def _vmem_physical_bytes():
    try:
        return int(pltpu.get_tpu_info().vmem_capacity_bytes)
    except Exception:  # not on TPU / interpret mode / old API
        return 64 * 1024 * 1024  # conservative: assume v7x (64 MiB per TC)


def _default_target_tile_bytes():
    # 8 MiB tiles on 128-MiB-VMEM parts (v5e/v6e), 4 MiB on v7x (64 MiB).
    return 8 * 1024 * 1024 if _vmem_physical_bytes() >= 96 * 1024 * 1024 \
        else 4 * 1024 * 1024


def learned_positional_encoding(x, pos_enc, *,
                                target_tile_bytes=None,
                                donate_x=False,
                                force_pallas=False):
    """x: (B, S, D); pos_enc: (1, num_patches+1, D). Returns x + pos_enc[:, :S, :]."""
    B, S, D = x.shape
    P = pos_enc.shape[1]
    assert S <= P, (
        f"sequence length {S} exceeds positional table length {P} (num_patches + 1)")

    # Glue in plain JAX; elide slice / cast when they are no-ops.
    pos = pos_enc if S == P else pos_enc[:, :S, :]
    if pos.dtype != x.dtype:
        pos = pos.astype(x.dtype)

    itemsize = jnp.dtype(x.dtype).itemsize
    total_bytes = B * S * D * itemsize

    # Tiny-input bypass: kernel launch + pipeline setup dominates below ~1 MiB.
    if total_bytes < (1 << 20) and not force_pallas:
        return x + pos

    if target_tile_bytes is None:
        target_tile_bytes = _default_target_tile_bytes()

    SD = S * D
    x2d = x.reshape(B, SD)
    pos2d = pos.reshape(1, SD)

    row_bytes = SD * itemsize
    sub_mult = _sublane_multiple(x.dtype)
    min_rows = B if B <= sub_mult else sub_mult

    # --- Joint (rows, lane-chunk) tile sizing -------------------------------
    if min_rows * row_bytes <= target_tile_bytes or SD < 2 * _LANE:
        # Full rows per block; stack as many batch rows as the target allows.
        C = SD
        tb = max(1, target_tile_bytes // row_bytes)
        if tb >= B:
            tb = B
        else:
            tb = max(sub_mult, (tb // sub_mult) * sub_mult)
            tb = min(tb, B)
    else:
        # Wide rows: minimal sublane-dense row group, split the lane axis into
        # 128-multiple chunks so the tile stays near the target on every part.
        tb = min_rows
        C = (target_tile_bytes // (tb * itemsize)) // _LANE * _LANE
        C = int(min(max(C, _LANE), SD))

    grid_b = pl.cdiv(B, tb)
    grid_c = pl.cdiv(SD, C)

    # v7x occupancy: make sure the parallel grid has >= 2 steps for real work.
    if grid_b * grid_c < 2 and total_bytes >= (2 << 20):
        if B >= 2 * sub_mult:
            tb = max(sub_mult, ((B + 1) // 2) // sub_mult * sub_mult)
        elif SD >= 2 * _LANE:
            C = max(_LANE, (SD // 2) // _LANE * _LANE)
        grid_b = pl.cdiv(B, tb)
        grid_c = pl.cdiv(SD, C)

    # --- VMEM budget ---------------------------------------------------------
    chunk_bytes = C * itemsize
    tile_bytes = tb * chunk_bytes
    # 2 double-buffered streams (x, out) + (up to) double-buffered pos chunk + slack.
    needed = 2 * 2 * tile_bytes + 2 * chunk_bytes + (1 << 20)
    cap = max(32 * 1024 * 1024, _vmem_physical_bytes() * 3 // 4)  # <=48 MiB on v7x
    vmem_limit = int(min(max(needed, 32 * 1024 * 1024), cap))

    # --- pallas_call ---------------------------------------------------------
    def _pos_spec(single_buffer):
        if single_buffer:
            # Constant block index across the whole grid: DMA'd once, never
            # revolves -> a single buffer saves one chunk of VMEM.
            return pl.BlockSpec((1, C), lambda i, j: (0, j),
                                pipeline_mode=pl.Buffered(1))
        return pl.BlockSpec((1, C), lambda i, j: (0, j))

    def _call(single_buffer_pos):
        return pl.pallas_call(
            _add_pos_kernel,
            out_shape=jax.ShapeDtypeStruct((B, SD), x.dtype),
            grid_spec=pl.GridSpec(
                grid=(grid_b, grid_c),
                in_specs=[
                    pl.BlockSpec((tb, C), lambda i, j: (i, j)),  # streamed x tiles
                    _pos_spec(single_buffer_pos),                # resident pos chunk
                ],
                out_specs=pl.BlockSpec((tb, C), lambda i, j: (i, j)),
            ),
            compiler_params=pltpu.CompilerParams(
                dimension_semantics=("parallel", "parallel"),
                vmem_limit_bytes=vmem_limit,
            ),
            input_output_aliases=({0: 0} if donate_x else {}),
        )(x2d, pos2d)

    single_buffer_pos = (grid_c == 1) and hasattr(pl, "Buffered")
    try:
        out2d = _call(single_buffer_pos)
    except Exception:
        if not single_buffer_pos:
            raise
        out2d = _call(False)  # fallback: default double-buffered pos block

    return out2d.reshape(B, S, D)


def init_positional_encoding(key, num_patches, embedding_dim, std=0.02,
                             mean=0.0, a=-2.0, b=2.0, dtype=jnp.float32):
    # PyTorch nn.init.trunc_normal_(std=0.02, a=-2, b=2) truncates at ABSOLUTE
    # +/-2 (i.e. +/-100 sigma for sigma=0.02) -- effectively an untruncated
    # normal.  Sample N(mean, std) and clip to [a, b] to match that behavior.
    shape = (1, num_patches + 1, embedding_dim)
    vals = mean + std * jax.random.normal(key, shape, dtype=dtype)
    return jnp.clip(vals, a, b)


if __name__ == "__main__":
    key = jax.random.PRNGKey(0)
    k_x, k_pos = jax.random.split(key)

    batch = 2
    num_patches = 8
    embedding_dim = 32
    seq = 8  # x.size(1) <= num_patches + 1

    x = jax.random.normal(k_x, (batch, seq, embedding_dim), dtype=jnp.float32)
    pos_enc = init_positional_encoding(k_pos, num_patches, embedding_dim)

    # force_pallas=True so the kernel path is exercised even at this tiny size
    # (production callers would let the <1 MiB bypass take the fused XLA add).
    out = learned_positional_encoding(x, pos_enc, force_pallas=True)
    out = jax.block_until_ready(out)

    # Correctness check against the plain-JAX reference of the PyTorch forward.
    ref = x + pos_enc[:, :seq, :]
    assert out.shape == (batch, seq, embedding_dim)
    assert jnp.allclose(out, ref, atol=1e-6), "mismatch vs reference"

    print("KERNEL_OK")
</pallas_src>

<mosaic_0001>
module attributes {stable_mosaic.version = 11 : i64} {
  func.func @_add_pos_kernel(%arg0: i32, %arg1: i32, %arg2: memref<2x256xf32, #tpu.memory_space<vmem>>, %arg3: memref<1x256xf32, #tpu.memory_space<vmem>>, %arg4: memref<2x256xf32, #tpu.memory_space<vmem>>) attributes {dimension_semantics = [#tpu.dimension_semantics<parallel>, #tpu.dimension_semantics<parallel>], iteration_bounds = array<i64: 1, 1>, scalar_prefetch = 0 : i64, scratch_operands = 0 : i64, tpu.core_type = #tpu.core_type<tc>, window_params = [{transform_indices = @transform_0, window_bounds = array<i64: 2, 256>}, {pipeline_mode = #tpu.pipeline_mode<synchronous>, transform_indices = @transform_1, window_bounds = array<i64: 1, 256>}, {transform_indices = @transform_2, window_bounds = array<i64: 2, 256>}]} {
    %c0 = arith.constant 0 : index
    %c0_0 = arith.constant 0 : index
    %0 = vector.load %arg2[%c0, %c0_0] : memref<2x256xf32, #tpu.memory_space<vmem>>, vector<2x256xf32>
    %c0_1 = arith.constant 0 : index
    %c0_2 = arith.constant 0 : index
    %1 = vector.load %arg3[%c0_1, %c0_2] : memref<1x256xf32, #tpu.memory_space<vmem>>, vector<1x256xf32>
    %2 = vector.broadcast %1 : vector<1x256xf32> to vector<2x256xf32>
    %3 = arith.addf %0, %2 : vector<2x256xf32>
    %c0_3 = arith.constant 0 : index
    %c0_4 = arith.constant 0 : index
    %4 = vector.load %arg4[%c0_3, %c0_4] : memref<2x256xf32, #tpu.memory_space<vmem>>, vector<2x256xf32>
    tpu.vector_store %arg4[%c0_3, %c0_4], %3 {strides = array<i32>} : memref<2x256xf32, #tpu.memory_space<vmem>>, vector<2x256xf32>,
    return
  }
  func.func @transform_0(%arg0: i32, %arg1: i32) -> (i32, i32) {
    %c0_i32 = arith.constant 0 : i32
    return %arg0, %arg1 : i32, i32
  }
  func.func @transform_1(%arg0: i32, %arg1: i32) -> (i32, i32) {
    %c0_i32 = arith.constant 0 : i32
    %c0_i32_0 = arith.constant 0 : i32
    return %c0_i32, %arg1 : i32, i32
  }
  func.func @transform_2(%arg0: i32, %arg1: i32) -> (i32, i32) {
    %c0_i32 = arith.constant 0 : i32
    return %arg0, %arg1 : i32, i32
  }
}

module attributes {stable_mosaic.version = 11 : i64} {
  func.func @_add_pos_kernel(%arg0: i32, %arg1: i32, %arg2: memref<2x256xf32, #tpu.memory_space<vmem>>, %arg3: memref<1x256xf32, #tpu.memory_space<vmem>>, %arg4: memref<2x256xf32, #tpu.memory_space<vmem>>) attributes {dimension_semantics = [#tpu.dimension_semantics<parallel>, #tpu.dimension_semantics<parallel>], iteration_bounds = array<i64: 1, 1>, scalar_prefetch = 0 : i64, scratch_operands = 0 : i64, tpu.core_type = #tpu.core_type<tc>, window_params = [{transform_indices = @transform_0, window_bounds = array<i64: 2, 256>}, {transform_indices = @transform_1, window_bounds = array<i64: 1, 256>}, {transform_indices = @transform_2, window_bounds = array<i64: 2, 256>}]} {
    %c0 = arith.constant 0 : index
    %c0_0 = arith.constant 0 : index
    %0 = vector.load %arg2[%c0, %c0_0] : memref<2x256xf32, #tpu.memory_space<vmem>>, vector<2x256xf32>
    %c0_1 = arith.constant 0 : index
    %c0_2 = arith.constant 0 : index
    %1 = vector.load %arg3[%c0_1, %c0_2] : memref<1x256xf32, #tpu.memory_space<vmem>>, vector<1x256xf32>
    %2 = vector.broadcast %1 : vector<1x256xf32> to vector<2x256xf32>
    %3 = arith.addf %0, %2 : vector<2x256xf32>
    %c0_3 = arith.constant 0 : index
    %c0_4 = arith.constant 0 : index
    %4 = vector.load %arg4[%c0_3, %c0_4] : memref<2x256xf32, #tpu.memory_space<vmem>>, vector<2x256xf32>
    tpu.vector_store %arg4[%c0_3, %c0_4], %3 {strides = array<i32>} : memref<2x256xf32, #tpu.memory_space<vmem>>, vector<2x256xf32>,
    return
  }
  func.func @transform_0(%arg0: i32, %arg1: i32) -> (i32, i32) {
    %c0_i32 = arith.constant 0 : i32
    return %arg0, %arg1 : i32, i32
  }
  func.func @transform_1(%arg0: i32, %arg1: i32) -> (i32, i32) {
    %c0_i32 = arith.constant 0 : i32
    %c0_i32_0 = arith.constant 0 : i32
    return %c0_i32, %arg1 : i32, i32
  }
  func.func @transform_2(%arg0: i32, %arg1: i32) -> (i32, i32) {
    %c0_i32 = arith.constant 0 : i32
    return %arg0, %arg1 : i32, i32
  }
}

</mosaic_0001>

<llo_original>
// kernel: tpu_custom_call.1
$region0: #{tpu_custom_call.1}
  #allocation0 [shape = 'u32[]', space=smem, size = 0x4, offset = 0x4, fixed_abs, tag = 'smem constant byte address 0x4 - core index']
  #allocation1 [shape = 'u32[72,128]{1,0:T(1,128)}', space=vmem, size = 0x9000, scoped, tag = 'internal scratch']
  %s0 = inlined_call_operand.hbm [shape: f32[2,256], index: 0, kind: input, shape index: {}]
  %s1 = inlined_call_operand.hbm [shape: f32[1,256], index: 1, kind: input, shape index: {}]
  %s2 = inlined_call_operand.hbm [shape: f32[2,256], index: 2, kind: output, shape index: {}]
  %s3 = sld [smem:[#allocation0]]
  $region26: #{tpu_custom_call.1} parent=0
    _
  %s5 = ssub.s32 1, %s3
  %s6 = scalar_select 0, %s5, %s3
  $region1: #{tpu_custom_call.1} parent=0
    #allocation2 [shape = 'u8[2048]{0}', space=vmem, size = 0x800, scoped, tag = 'input window, operand 0, single buffered']
    #allocation3 [shape = 's32[1]{0}', space=sflag, size = 0x4, scoped, tag = 'scoped memory for tpu_custom_call.1']
    #allocation4 [shape = 's32[1]{0}', space=sflag, size = 0x4, scoped, tag = 'scoped memory for tpu_custom_call.1']
    #allocation5 [shape = 'u8[1024]{0}', space=vmem, size = 0x400, scoped, tag = 'input window, operand 1, single buffered']
    #allocation6 [shape = 's32[1]{0}', space=sflag, size = 0x4, scoped, tag = 'scoped memory for tpu_custom_call.1']
    #allocation7 [shape = 'u8[2048]{0}', space=vmem, size = 0x800, scoped, tag = 'output window, operand 0, single buffered']
    %7 = vsyncpa [#allocation3], 0
    %8 = vsyncpa [#allocation6], 0
    %9 = vsyncpa [#allocation4], 0
    // Predicated region
    $region2: #{tpu_custom_call.1} parent=1 // pred_check
      _
    $region3: #{tpu_custom_call.1} parent=1 // pred_check_branch
      %11 = sbr.rel (0) target = $region5
    $region4: #{tpu_custom_call.1} parent=1 // pred_region
      %13 = vsyncadd [#allocation3], 0
      %s15 = sshll.u32 %s0, 4
      %s16 = int_to_ptr.hbm [resolvable:$true] %s15
      %s17 = sshll.u32 [#allocation2], 4
      %s18 = int_to_ptr.vmem [resolvable:$true] %s17
      %20 = dma.hbm_to_vmem [thread:$0]  %s16, 64, %s18, [#allocation3]
    $region5: #{tpu_custom_call.1} parent=1 // pred_fallthru
      _
    // Predicated region
    $region6: #{tpu_custom_call.1} parent=1 // pred_check
      _
    $region7: #{tpu_custom_call.1} parent=1 // pred_check_branch
      %22 = sbr.rel (0) target = $region9
    $region8: #{tpu_custom_call.1} parent=1 // pred_region
      %24 = vsyncadd [#allocation6], 0
      %s26 = sshll.u32 %s1, 4
      %s27 = int_to_ptr.hbm [resolvable:$true] %s26
      %s28 = sshll.u32 [#allocation5], 4
      %s29 = int_to_ptr.vmem [resolvable:$true] %s28
      %31 = dma.hbm_to_vmem [thread:$0]  %s27, 32, %s29, [#allocation6]
    $region9: #{tpu_custom_call.1} parent=1 // pred_fallthru
      _
    // Predicated region
    $region10: #{tpu_custom_call.1} parent=1 // pred_check
      _
    $region11: #{tpu_custom_call.1} parent=1 // pred_check_branch
      %33 = sbr.rel (0) target = $region13
    $region12: #{tpu_custom_call.1} parent=1 // pred_region
      %35 = dma.done [#allocation3], 64
    $region13: #{tpu_custom_call.1} parent=1 // pred_fallthru
      _
    // Predicated region
    $region14: #{tpu_custom_call.1} parent=1 // pred_check
      _
    $region15: #{tpu_custom_call.1} parent=1 // pred_check_branch
      %37 = sbr.rel (0) target = $region17
    $region16: #{tpu_custom_call.1} parent=1 // pred_region
      %39 = dma.done [#allocation6], 32
    $region17: #{tpu_custom_call.1} parent=1 // pred_fallthru
      _
    %v40 = vld [vmem:[#allocation2] sm:$0xf]
    %v41 = vld [vmem:[#allocation5] sm:$0x3]
    %v43 = vperm.slane %v41, 0
    %v44 = vperm.slane %v41, 1
    %v45 = vrot.slane %v44, 6
    %vm46 = vcmask 1041408
    %v47 = vsel %vm46, %v43, %v45
    %v49 = vadd.f32 %v40, %v47
    %50 = vst [vmem:[#allocation7] sm:$0xf] %v49
    // Predicated region
    $region18: #{tpu_custom_call.1} parent=1 // pred_check
      _
    $region19: #{tpu_custom_call.1} parent=1 // pred_check_branch
      %52 = sbr.rel (0) target = $region21
    $region20: #{tpu_custom_call.1} parent=1 // pred_region
      %54 = vsyncadd [#allocation4], 0
      %s56 = sshll.u32 [#allocation7], 4
      %s57 = int_to_ptr.vmem [resolvable:$true] %s56
      %s58 = sshll.u32 %s2, 4
      %s59 = int_to_ptr.hbm [resolvable:$true] %s58
      %61 = dma.vmem_to_hbm [thread:$0]  %s57, 64, %s59, [#allocation4]
    $region21: #{tpu_custom_call.1} parent=1 // pred_fallthru
      _
    // Predicated region
    $region22: #{tpu_custom_call.1} parent=1 // pred_check
      _
    $region23: #{tpu_custom_call.1} parent=1 // pred_check_branch
      %63 = sbr.rel (0) target = $region25
    $region24: #{tpu_custom_call.1} parent=1 // pred_region
      %65 = dma.done [#allocation4], 64
    $region25: #{tpu_custom_call.1} parent=1 // pred_fallthru
      _
    %66 = vsyncpa [#allocation3], 1
    %67 = vsyncpa [#allocation6], 1
    %68 = vsyncpa [#allocation4], 1

// kernel: tpu_custom_call.1
$region0: #{tpu_custom_call.1}
  #allocation0 [shape = 'u32[]', space=smem, size = 0x4, offset = 0x4, fixed_abs, tag = 'smem constant byte address 0x4 - core index']
  #allocation1 [shape = 'u32[72,128]{1,0:T(1,128)}', space=vmem, size = 0x9000, scoped, tag = 'internal scratch']
  %s0 = inlined_call_operand.hbm [shape: f32[2,256], index: 0, kind: input, shape index: {}]
  %s1 = inlined_call_operand.hbm [shape: f32[1,256], index: 1, kind: input, shape index: {}]
  %s2 = inlined_call_operand.hbm [shape: f32[2,256], index: 2, kind: output, shape index: {}]
  %s3 = sld [smem:[#allocation0]]
  $region26: #{tpu_custom_call.1} parent=0
    _
  %s5 = ssub.s32 1, %s3
  %s6 = scalar_select 0, %s5, %s3
  $region1: #{tpu_custom_call.1} parent=0
    #allocation2 [shape = 'u8[2048]{0}', space=vmem, size = 0x800, scoped, tag = 'input window, operand 0, single buffered']
    #allocation3 [shape = 's32[1]{0}', space=sflag, size = 0x4, scoped, tag = 'scoped memory for tpu_custom_call.1']
    #allocation4 [shape = 's32[1]{0}', space=sflag, size = 0x4, scoped, tag = 'scoped memory for tpu_custom_call.1']
    #allocation5 [shape = 'u8[1024]{0}', space=vmem, size = 0x400, scoped, tag = 'input window, operand 1, single buffered']
    #allocation6 [shape = 's32[1]{0}', space=sflag, size = 0x4, scoped, tag = 'scoped memory for tpu_custom_call.1']
    #allocation7 [shape = 'u8[2048]{0}', space=vmem, size = 0x800, scoped, tag = 'output window, operand 0, single buffered']
    %7 = vsyncpa [#allocation3], 0
    %8 = vsyncpa [#allocation6], 0
    %9 = vsyncpa [#allocation4], 0
    // Predicated region
    $region2: #{tpu_custom_call.1} parent=1 // pred_check
      _
    $region3: #{tpu_custom_call.1} parent=1 // pred_check_branch
      %11 = sbr.rel (0) target = $region5
    $region4: #{tpu_custom_call.1} parent=1 // pred_region
      %13 = vsyncadd [#allocation3], 0
      %s15 = sshll.u32 %s0, 4
      %s16 = int_to_ptr.hbm [resolvable:$true] %s15
      %s17 = sshll.u32 [#allocation2], 4
      %s18 = int_to_ptr.vmem [resolvable:$true] %s17
      %20 = dma.hbm_to_vmem [thread:$0]  %s16, 64, %s18, [#allocation3]
    $region5: #{tpu_custom_call.1} parent=1 // pred_fallthru
      _
    // Predicated region
    $region6: #{tpu_custom_call.1} parent=1 // pred_check
      _
    $region7: #{tpu_custom_call.1} parent=1 // pred_check_branch
      %22 = sbr.rel (0) target = $region9
    $region8: #{tpu_custom_call.1} parent=1 // pred_region
      %24 = vsyncadd [#allocation6], 0
      %s26 = sshll.u32 %s1, 4
      %s27 = int_to_ptr.hbm [resolvable:$true] %s26
      %s28 = sshll.u32 [#allocation5], 4
      %s29 = int_to_ptr.vmem [resolvable:$true] %s28
      %31 = dma.hbm_to_vmem [thread:$0]  %s27, 32, %s29, [#allocation6]
    $region9: #{tpu_custom_call.1} parent=1 // pred_fallthru
      _
    // Predicated region
    $region10: #{tpu_custom_call.1} parent=1 // pred_check
      _
    $region11: #{tpu_custom_call.1} parent=1 // pred_check_branch
      %33 = sbr.rel (0) target = $region13
    $region12: #{tpu_custom_call.1} parent=1 // pred_region
      %35 = dma.done [#allocation3], 64
    $region13: #{tpu_custom_call.1} parent=1 // pred_fallthru
      _
    // Predicated region
    $region14: #{tpu_custom_call.1} parent=1 // pred_check
      _
    $region15: #{tpu_custom_call.1} parent=1 // pred_check_branch
      %37 = sbr.rel (0) target = $region17
    $region16: #{tpu_custom_call.1} parent=1 // pred_region
      %39 = dma.done [#allocation6], 32
    $region17: #{tpu_custom_call.1} parent=1 // pred_fallthru
      _
    %v40 = vld [vmem:[#allocation2] sm:$0xf]
    %v41 = vld [vmem:[#allocation5] sm:$0x3]
    %v43 = vperm.slane %v41, 0
    %v44 = vperm.slane %v41, 1
    %v45 = vrot.slane %v44, 6
    %vm46 = vcmask 1041408
    %v47 = vsel %vm46, %v43, %v45
    %v49 = vadd.f32 %v40, %v47
    %50 = vst [vmem:[#allocation7] sm:$0xf] %v49
    // Predicated region
    $region18: #{tpu_custom_call.1} parent=1 // pred_check
      _
    $region19: #{tpu_custom_call.1} parent=1 // pred_check_branch
      %52 = sbr.rel (0) target = $region21
    $region20: #{tpu_custom_call.1} parent=1 // pred_region
      %54 = vsyncadd [#allocation4], 0
      %s56 = sshll.u32 [#allocation7], 4
      %s57 = int_to_ptr.vmem [resolvable:$true] %s56
      %s58 = sshll.u32 %s2, 4
      %s59 = int_to_ptr.hbm [resolvable:$true] %s58
      %61 = dma.vmem_to_hbm [thread:$0]  %s57, 64, %s59, [#allocation4]
    $region21: #{tpu_custom_call.1} parent=1 // pred_fallthru
      _
    // Predicated region
    $region22: #{tpu_custom_call.1} parent=1 // pred_check
      _
    $region23: #{tpu_custom_call.1} parent=1 // pred_check_branch
      %63 = sbr.rel (0) target = $region25
    $region24: #{tpu_custom_call.1} parent=1 // pred_region
      %65 = dma.done [#allocation4], 64
    $region25: #{tpu_custom_call.1} parent=1 // pred_fallthru
      _
    %66 = vsyncpa [#allocation3], 1
    %67 = vsyncpa [#allocation6], 1
    %68 = vsyncpa [#allocation4], 1

</llo_original>
